<compile_context>
chip_gen: v7x
topology: tpu7x:2x2x1
jax: 0.10.0
libtpu: 0.0.40
codegen_flags: <defaults>
</compile_context>

<pallas_src>
import functools

import jax
import jax.numpy as jnp
from jax.experimental import pallas as pl
from jax.experimental.pallas import tpu as pltpu


_MAX_NB = 16  # cap on batch folding (bounds the static unroll in the kernel)


def _vmem_capacity_bytes():
    try:
        return int(pltpu.get_tpu_info().vmem_capacity_bytes)
    except Exception:
        return 64 << 20  # conservative fallback: v7x-sized VMEM


def _stream_budget_bytes(vmem_cap):
    """Per-grid-step streaming budget (x tile + out tile bytes)."""
    try:
        kind = jax.devices()[0].device_kind.lower()
    except Exception:
        kind = ""
    if "v5" in kind:
        return 4 << 20   # v5e: ~0.82 TB/s HBM amortizes the step cost sooner
    return 8 << 20       # v6e / v7x: bigger tiles to ride 1.4-3.2 TB/s HBM


def _outconv_kernel(x_ref, w_ref, b_ref, o_ref, *, nb):
    # w: (Cout, Cin), b: (Cout, 1) broadcasting over lanes.
    w = w_ref[...]
    b = b_ref[...]
    # HIGHEST precision is free here (HBM-bound kernel) and matches f32 conv
    # semantics of the PyTorch module.
    if nb == 1:
        # x: (Cin, ts), o: (Cout, ts)
        acc = jnp.dot(w, x_ref[...], preferred_element_type=jnp.float32,
                      precision=jax.lax.Precision.HIGHEST)
        o_ref[...] = (acc + b).astype(o_ref.dtype)
    else:
        # Short static unroll over the folded batch; each iteration is a
        # lane-dense (Cout, Cin) x (Cin, ts) MXU matmul.
        for i in range(nb):
            acc = jnp.dot(w, x_ref[i], preferred_element_type=jnp.float32,
                          precision=jax.lax.Precision.HIGHEST)
            o_ref[i] = (acc + b).astype(o_ref.dtype)


@functools.partial(jax.jit, static_argnames=("budget_bytes",))
def outconv_forward(x_nchw, weight, bias, *, budget_bytes=None):
    """1x1 conv forward.

    x_nchw: (N, Cin, H, W)
    weight: (Cout, Cin) or (Cout, Cin, 1, 1)
    bias:   (Cout,)
    returns (N, Cout, H, W)
    """
    N, Cin, H, W = x_nchw.shape
    if weight.ndim == 4:
        weight = weight.reshape(weight.shape[0], weight.shape[1])
    Cout = weight.shape[0]
    S = H * W
    itemsize = jnp.dtype(x_nchw.dtype).itemsize

    # Cast params once, outside the kernel (avoids a per-step convert).
    weight = weight.astype(x_nchw.dtype)
    bias2d = bias.reshape(Cout, 1).astype(x_nchw.dtype)

    # (N, Cin, H, W) -> (N, Cin, S): contiguous reshape, no data movement.
    x3 = x_nchw.reshape(N, Cin, S)

    s_pad = -(-S // 128) * 128                      # lane-padded spatial extent
    vmem_cap = _vmem_capacity_bytes()
    budget = budget_bytes if budget_bytes is not None else _stream_budget_bytes(vmem_cap)
    per_col = (Cin + Cout) * itemsize               # x + out bytes per spatial column

    if s_pad * per_col >= budget:
        # Large images: tile the spatial axis; one image per grid step.
        nb = 1
        ts = min(s_pad, max(128, (budget // per_col) // 128 * 128))
    else:
        # Small images: whole (lane-padded) image per tile; fold batch to reach
        # the streaming budget and amortize the fixed per-step cost.
        ts = s_pad
        nb = max(1, min(N, budget // (s_pad * per_col), _MAX_NB))

    n_blocks, s_blocks = pl.cdiv(N, nb), pl.cdiv(S, ts)
    # v7x has 2 TensorCores: keep >= 2 grid points on a "parallel" axis if we can.
    if n_blocks * s_blocks < 2:
        if N >= 2:
            nb = max(1, N // 2)
            n_blocks = pl.cdiv(N, nb)
        elif s_pad >= 256:
            ts = -(-(s_pad // 2) // 128) * 128
            s_blocks = pl.cdiv(S, ts)
        # else: a single tiny tile; nothing worth splitting.
    grid = (n_blocks, s_blocks)

    # VMEM accounting: double-buffered x/out tiles, double-buffered weight/bias,
    # and the implicit f32 matmul accumulator.  Generation-dependent cap.
    # (ts/nb were derived from `budget` <= 8 MiB, so `need` stays well under the
    #  cap for any realistic OutConv shape.)
    x_tile_bytes = nb * Cin * ts * itemsize
    o_tile_bytes = nb * Cout * ts * itemsize
    acc_bytes = 2 * Cout * ts * 4
    wb_bytes = (Cout * Cin + Cout) * itemsize
    need = 2 * (x_tile_bytes + o_tile_bytes) + acc_bytes + 2 * wb_bytes
    cap = min(vmem_cap * 5 // 8, 96 << 20)          # ~40 MiB on v7x, ~80 MiB on v5e/v6e
    vmem_limit = int(min(max(need + need // 4, 16 << 20), cap))

    if nb == 1:
        x_block, o_block = (None, Cin, ts), (None, Cout, ts)
    else:
        x_block, o_block = (nb, Cin, ts), (nb, Cout, ts)

    cost = pl.CostEstimate(
        flops=2 * N * S * Cin * Cout,
        transcendentals=0,
        bytes_accessed=(N * Cin * S + Cout * Cin + Cout + N * Cout * S) * itemsize,
    )

    out3 = pl.pallas_call(
        functools.partial(_outconv_kernel, nb=nb),
        out_shape=jax.ShapeDtypeStruct((N, Cout, S), x_nchw.dtype),
        grid_spec=pltpu.PrefetchScalarGridSpec(
            num_scalar_prefetch=0,
            grid=grid,
            in_specs=[
                # x tile: stream (nb, Cin, ts) with lane-dense spatial axis.
                pl.BlockSpec(x_block, lambda n, s: (n, 0, s)),
                # full weight, resident across the grid
                pl.BlockSpec((Cout, Cin), lambda n, s: (0, 0)),
                # full bias (Cout, 1), broadcast over lanes in-kernel
                pl.BlockSpec((Cout, 1), lambda n, s: (0, 0)),
            ],
            out_specs=pl.BlockSpec(o_block, lambda n, s: (n, 0, s)),
        ),
        compiler_params=pltpu.CompilerParams(
            dimension_semantics=("parallel", "parallel"),
            vmem_limit_bytes=vmem_limit,
        ),
        cost_estimate=cost,
    )(x3, weight, bias2d)

    # (N, Cout, S) -> NCHW: free contiguous reshape.
    return out3.reshape(N, Cout, H, W)


def init_outconv_params(key, in_channels, out_channels, dtype=jnp.float32):
    # Matches nn.Conv2d default init: U(-1/sqrt(fan_in), 1/sqrt(fan_in)),
    # fan_in = in_channels * 1 * 1 for a 1x1 kernel.
    kw, kb = jax.random.split(key)
    bound = 1.0 / jnp.sqrt(jnp.asarray(in_channels, dtype))
    weight = jax.random.uniform(
        kw, (out_channels, in_channels), dtype, minval=-bound, maxval=bound
    )
    bias = jax.random.uniform(
        kb, (out_channels,), dtype, minval=-bound, maxval=bound
    )
    return weight, bias


def _reference(x, weight, bias):
    return (
        jnp.einsum("nchw,oc->nohw", x, weight, precision=jax.lax.Precision.HIGHEST)
        + bias[None, :, None, None]
    )


if __name__ == "__main__":
    key = jax.random.PRNGKey(0)
    k_x, k_p, k_x2, k_x3, k_p3 = jax.random.split(key, 5)

    # 1) Primary small shape: small image -> batch-fold / even-grid path.
    N, Cin, H, W = 2, 4, 16, 16
    Cout = 3
    x = jax.random.normal(k_x, (N, Cin, H, W), jnp.float32)
    weight, bias = init_outconv_params(k_p, Cin, Cout)
    y = jax.block_until_ready(outconv_forward(x, weight, bias))
    y_ref = _reference(x, weight, bias)
    assert y.shape == (N, Cout, H, W)
    assert jnp.allclose(y, y_ref, atol=1e-4, rtol=1e-4)

    # 2) Spatial remainder: H*W not a multiple of the 128-lane tile.
    x2 = jax.random.normal(k_x2, (1, Cin, 10, 10), jnp.float32)
    y2 = jax.block_until_ready(outconv_forward(x2, weight, bias))
    assert y2.shape == (1, Cout, 10, 10)
    assert jnp.allclose(y2, _reference(x2, weight, bias), atol=1e-4, rtol=1e-4)

    # 3) Spatial-tiled path (forced via a tiny per-step budget) incl. a partial
    #    last spatial block.
    Cin3, Cout3 = 8, 3
    x3 = jax.random.normal(k_x3, (1, Cin3, 32, 36), jnp.float32)
    w3, b3 = init_outconv_params(k_p3, Cin3, Cout3)
    y3 = jax.block_until_ready(outconv_forward(x3, w3, b3, budget_bytes=16 << 10))
    assert y3.shape == (1, Cout3, 32, 36)
    assert jnp.allclose(y3, _reference(x3, w3, b3), atol=1e-4, rtol=1e-4)

    print("KERNEL_OK")
</pallas_src>

<mosaic_0001>
module attributes {stable_mosaic.version = 11 : i64} {
  func.func @_outconv_kernel(%arg0: i32, %arg1: i32, %arg2: memref<1x4x256xf32, #tpu.memory_space<vmem>>, %arg3: memref<3x4xf32, #tpu.memory_space<vmem>>, %arg4: memref<3x1xf32, #tpu.memory_space<vmem>>, %arg5: memref<1x3x256xf32, #tpu.memory_space<vmem>>) attributes {dimension_semantics = [#tpu.dimension_semantics<parallel>, #tpu.dimension_semantics<parallel>], iteration_bounds = array<i64: 2, 1>, scalar_prefetch = 0 : i64, scratch_operands = 0 : i64, tpu.core_type = #tpu.core_type<tc>, window_params = [{transform_indices = @transform_0, window_bounds = array<i64: 1, 4, 256>}, {pipeline_mode = #tpu.pipeline_mode<synchronous>, transform_indices = @transform_1, window_bounds = array<i64: 3, 4>}, {pipeline_mode = #tpu.pipeline_mode<synchronous>, transform_indices = @transform_2, window_bounds = array<i64: 3, 1>}, {transform_indices = @transform_3, window_bounds = array<i64: 1, 3, 256>}]} {
    %c0 = arith.constant 0 : index
    %c0_0 = arith.constant 0 : index
    %0 = vector.load %arg3[%c0, %c0_0] : memref<3x4xf32, #tpu.memory_space<vmem>>, vector<3x4xf32>
    %c0_1 = arith.constant 0 : index
    %c0_2 = arith.constant 0 : index
    %1 = vector.load %arg4[%c0_1, %c0_2] : memref<3x1xf32, #tpu.memory_space<vmem>>, vector<3x1xf32>
    %c0_3 = arith.constant 0 : index
    %c0_4 = arith.constant 0 : index
    %c0_5 = arith.constant 0 : index
    %2 = vector.load %arg2[%c0_3, %c0_4, %c0_5] : memref<1x4x256xf32, #tpu.memory_space<vmem>>, vector<1x4x256xf32>
    %3 = vector.shape_cast %2 : vector<1x4x256xf32> to vector<4x256xf32>
    %cst = arith.constant dense<0.000000e+00> : vector<3x256xf32>
    %4 = tpu.matmul %0, %3, %cst {dimension_numbers = #tpu.dot_dimension_numbers<[1], [0], [0], [1], [0, 0, 1, 1], [], []>, precision = #tpu.contract_precision<fp32>} : vector<3x4xf32>, vector<4x256xf32>, vector<3x256xf32> -> vector<3x256xf32>
    %5 = vector.broadcast %1 : vector<3x1xf32> to vector<3x256xf32>
    %6 = arith.addf %4, %5 : vector<3x256xf32>
    %c0_6 = arith.constant 0 : index
    %c0_7 = arith.constant 0 : index
    %c0_8 = arith.constant 0 : index
    %7 = vector.load %arg5[%c0_6, %c0_7, %c0_8] : memref<1x3x256xf32, #tpu.memory_space<vmem>>, vector<1x3x256xf32>
    %8 = vector.shape_cast %7 : vector<1x3x256xf32> to vector<3x256xf32>
    %9 = vector.shape_cast %6 : vector<3x256xf32> to vector<1x3x256xf32>
    tpu.vector_store %arg5[%c0_6, %c0_7, %c0_8], %9 {strides = array<i32>} : memref<1x3x256xf32, #tpu.memory_space<vmem>>, vector<1x3x256xf32>,
    return
  }
  func.func @transform_0(%arg0: i32, %arg1: i32) -> (i32, i32, i32) {
    %c0_i32 = arith.constant 0 : i32
    %c0_i32_0 = arith.constant 0 : i32
    return %arg0, %c0_i32, %arg1 : i32, i32, i32
  }
  func.func @transform_1(%arg0: i32, %arg1: i32) -> (i32, i32) {
    %c0_i32 = arith.constant 0 : i32
    %c0_i32_0 = arith.constant 0 : i32
    %c0_i32_1 = arith.constant 0 : i32
    return %c0_i32, %c0_i32_0 : i32, i32
  }
  func.func @transform_2(%arg0: i32, %arg1: i32) -> (i32, i32) {
    %c0_i32 = arith.constant 0 : i32
    %c0_i32_0 = arith.constant 0 : i32
    %c0_i32_1 = arith.constant 0 : i32
    return %c0_i32, %c0_i32_0 : i32, i32
  }
  func.func @transform_3(%arg0: i32, %arg1: i32) -> (i32, i32, i32) {
    %c0_i32 = arith.constant 0 : i32
    %c0_i32_0 = arith.constant 0 : i32
    return %arg0, %c0_i32, %arg1 : i32, i32, i32
  }
}

</mosaic_0001>

<llo_original>
// kernel: outconv_forward.1
$region0: #{outconv_forward.1}
  #allocation0 [shape = 'u32[]', space=smem, size = 0x4, offset = 0x4, fixed_abs, tag = 'smem constant byte address 0x4 - core index']
  #allocation1 [shape = 'u32[144,128]{1,0:T(1,128)}', space=vmem, size = 0x12000, scoped, tag = 'internal scratch']
  %s0 = inlined_call_operand.vmem [shape: f32[2,4,256], index: 0, kind: input, shape index: {}]
  %s1 = inlined_call_operand.vmem [shape: f32[3,4], index: 1, kind: input, shape index: {}]
  %s2 = inlined_call_operand.vmem [shape: f32[3,1], index: 2, kind: input, shape index: {}]
  %s3 = inlined_call_operand.vmem [shape: f32[2,3,256], index: 3, kind: output, shape index: {}]
  %s4 = sld [smem:[#allocation0]]
  $region45: #{outconv_forward.1} parent=0
    _
  %s6 = ssub.s32 1, %s4
  %s7 = scalar_select 0, %s6, %s4
  loop: start=0, step=1, limit=4
  $region2: #{outconv_forward.1} parent=0 // loop_pre_header
    _
  $region3: #{outconv_forward.1} parent=0 // loop_header
    %s9 = sphi 0, %s13
    %p10 = scmp.ge.s32.totalorder %s9, 4
    %s16 = sphi 0, %s28
    %s17 = sphi 0, %s24
    %s18 = sphi 0, %s16
    %s19 = sphi 0, %s17
    %s20 = sphi 0, %s18
    %s21 = sphi 0, %s19
    %s33 = sphi 0, %s35
    %s36 = sphi 0, %s33
    %s37 = sphi 0, %s36
    %s53 = sphi 0, %s37
    %s57 = sphi 0, %s57
    %s59 = sphi 0, %s57
    %s60 = sphi 0, %s59
    %s74 = sphi 0, %s60
    %s78 = sphi 0, %s78
    %s80 = sphi 0, %s78
    %s81 = sphi 0, %s80
    %s95 = sphi 0, %s81
    %s103 = sphi 0, %s105
    %s106 = sphi 0, %s103
    %s107 = sphi 0, %s106
    %s123 = sphi 0, %s107
  $region4: #{outconv_forward.1} parent=0 // loop_header_branch
    %12 = sbr.rel (%p10) target = $region8
  $region5: #{outconv_forward.1} parent=0 // loop_body
    %s14 = ssub.s32 %s9, 1
    %s15 = ssub.s32 %s9, 2
    %s22 = sadd.s32 1, %s17
    %p23 = scmp.ge.s32.totalorder %s22, 1
    %s24 = scalar_select %p23, 0, %s22
    %s25 = sadd.s32 1, %s16
    %s26 = scalar_select %p23, %s25, %s16
    %p27 = scmp.ge.s32.totalorder %s26, 2
    %s28 = scalar_select %p27, 0, %s26
    %s29 = ssub.s32 %s16, %s28
    %s30 = ssub.s32 %s17, %s24
    %s31 = sor.u32 %s29, %s30
    %p32 = scmp.eq.s32.totalorder %s31, 0
    %s34 = sadd.s32 %s33, 1
    %s35 = scalar_select %p32, %s33, %s34
    %p38 = pneg %p32
    %p39 = scmp.eq.s32.totalorder %s9, 1
    %p40 = por %p38, %p39
    %p41 = scmp.ne.s32.totalorder %s33, %s36
    %p42 = scmp.eq.s32.totalorder %s9, 0
    %p43 = por %p41, %p42
    %p44 = scmp.ne.s32.totalorder %s33, %s36
    %p45 = scmp.eq.s32.totalorder %s14, 1
    %p46 = por %p44, %p45
    %p47 = scmp.ne.s32.totalorder %s36, %s37
    %p48 = scmp.eq.s32.totalorder %s14, 0
    %p49 = por %p47, %p48
    %p50 = scmp.ne.s32.totalorder %s36, %s37
    %p51 = scmp.eq.s32.totalorder %s15, 1
    %p52 = por %p50, %p51
    %p54 = scmp.ne.s32.totalorder %s37, %s53
    %p55 = scmp.eq.s32.totalorder %s15, 0
    %p56 = por %p54, %p55
    %s58 = sadd.s32 %s57, 1
    %p61 = scmp.eq.s32.totalorder %s9, 1
    %p62 = scmp.ne.s32.totalorder %s57, %s59
    %p63 = scmp.eq.s32.totalorder %s9, 0
    %p64 = por %p62, %p63
    %p65 = scmp.ne.s32.totalorder %s57, %s59
    %p66 = scmp.eq.s32.totalorder %s14, 1
    %p67 = por %p65, %p66
    %p68 = scmp.ne.s32.totalorder %s59, %s60
    %p69 = scmp.eq.s32.totalorder %s14, 0
    %p70 = por %p68, %p69
    %p71 = scmp.ne.s32.totalorder %s59, %s60
    %p72 = scmp.eq.s32.totalorder %s15, 1
    %p73 = por %p71, %p72
    %p75 = scmp.ne.s32.totalorder %s60, %s74
    %p76 = scmp.eq.s32.totalorder %s15, 0
    %p77 = por %p75, %p76
    %s79 = sadd.s32 %s78, 1
    %p82 = scmp.eq.s32.totalorder %s9, 1
    %p83 = scmp.ne.s32.totalorder %s78, %s80
    %p84 = scmp.eq.s32.totalorder %s9, 0
    %p85 = por %p83, %p84
    %p86 = scmp.ne.s32.totalorder %s78, %s80
    %p87 = scmp.eq.s32.totalorder %s14, 1
    %p88 = por %p86, %p87
    %p89 = scmp.ne.s32.totalorder %s80, %s81
    %p90 = scmp.eq.s32.totalorder %s14, 0
    %p91 = por %p89, %p90
    %p92 = scmp.ne.s32.totalorder %s80, %s81
    %p93 = scmp.eq.s32.totalorder %s15, 1
    %p94 = por %p92, %p93
    %p96 = scmp.ne.s32.totalorder %s81, %s95
    %p97 = scmp.eq.s32.totalorder %s15, 0
    %p98 = por %p96, %p97
    %s99 = ssub.s32 %s16, %s28
    %s100 = ssub.s32 %s17, %s24
    %s101 = sor.u32 %s99, %s100
    %p102 = scmp.eq.s32.totalorder %s101, 0
    %s104 = sadd.s32 %s103, 1
    %s105 = scalar_select %p102, %s103, %s104
    %p108 = pneg %p102
    %p109 = scmp.eq.s32.totalorder %s9, 1
    %p110 = por %p108, %p109
    %p111 = scmp.ne.s32.totalorder %s103, %s106
    %p112 = scmp.eq.s32.totalorder %s9, 0
    %p113 = por %p111, %p112
    %p114 = scmp.ne.s32.totalorder %s103, %s106
    %p115 = scmp.eq.s32.totalorder %s14, 1
    %p116 = por %p114, %p115
    %p117 = scmp.ne.s32.totalorder %s106, %s107
    %p118 = scmp.eq.s32.totalorder %s14, 0
    %p119 = por %p117, %p118
    %p120 = scmp.ne.s32.totalorder %s106, %s107
    %p121 = scmp.eq.s32.totalorder %s15, 1
    %p122 = por %p120, %p121
    %p124 = scmp.ne.s32.totalorder %s107, %s123
    %p125 = scmp.eq.s32.totalorder %s15, 0
    %p126 = por %p124, %p125
    %p127 = scmp.le.s32.totalorder 1, %s9
    %p128 = scmp.lt.s32.totalorder %s9, 3
    %p129 = pnand %p127, %p128
    %p130 = pneg %p129
    // Predicated region
    $region9: #{outconv_forward.1} parent=5 // pred_check
      _
    $region10: #{outconv_forward.1} parent=5 // pred_check_branch
      %132 = sbr.rel (%p129) target = $region12
    $region11: #{outconv_forward.1} parent=5 // pred_region
      %s133 = ssub.s32 %s9, 1
      // Predicated region
      $region13: #{outconv_forward.1} parent=11 // pred_check
        %p134 = pneg %p70
      $region14: #{outconv_forward.1} parent=11 // pred_check_branch
        %136 = sbr.rel (%p134) target = $region16
      $region15: #{outconv_forward.1} parent=11 // pred_region
        _
      $region16: #{outconv_forward.1} parent=11 // pred_fallthru
        _
      // Predicated region
      $region17: #{outconv_forward.1} parent=11 // pred_check
        %p137 = pneg %p91
      $region18: #{outconv_forward.1} parent=11 // pred_check_branch
        %139 = sbr.rel (%p137) target = $region20
      $region19: #{outconv_forward.1} parent=11 // pred_region
        _
      $region20: #{outconv_forward.1} parent=11 // pred_fallthru
        _
    $region12: #{outconv_forward.1} parent=5 // pred_fallthru
      _
    %p140 = scmp.lt.s32.totalorder %s9, 2
    // Predicated region
    $region21: #{outconv_forward.1} parent=5 // pred_check
      %p141 = pneg %p140
    $region22: #{outconv_forward.1} parent=5 // pred_check_branch
      %143 = sbr.rel (%p141) target = $region24
    $region23: #{outconv_forward.1} parent=5 // pred_region
      // Predicated region
      $region25: #{outconv_forward.1} parent=23 // pred_check
        %p144 = pneg %p43
      $region26: #{outconv_forward.1} parent=23 // pred_check_branch
        %146 = sbr.rel (%p144) target = $region28
      $region27: #{outconv_forward.1} parent=23 // pred_region
        %s147 = smul.u32 2, %s17
        %p148 = scmp.lt.s32.totalorder %s16, 1
        %s149 = scalar_select %p148, %s16, 1
        %p150 = scmp.lt.s32.totalorder %s147, 1
        %s151 = scalar_select %p150, %s147, 1
        %s152 = smul.addr %s149, 2
        %s153 = sadd.s32 %s151, %s152
        %s154 = smul.addr %s153, 4
        %s155 = scalar_lea.vmem %s0, %s154
        %s156 = smul.u32 2, %s17
      $region28: #{outconv_forward.1} parent=23 // pred_fallthru
        _
    $region24: #{outconv_forward.1} parent=5 // pred_fallthru
      _
    %p157 = scmp.le.s32.totalorder 1, %s9
    %p158 = scmp.lt.s32.totalorder %s9, 3
    %p159 = pnand %p157, %p158
    %p160 = pneg %p159
    // Predicated region
    $region29: #{outconv_forward.1} parent=5 // pred_check
      _
    $region30: #{outconv_forward.1} parent=5 // pred_check_branch
      %162 = sbr.rel (%p159) target = $region32
    $region31: #{outconv_forward.1} parent=5 // pred_region
      %s163 = ssub.s32 %s9, 1
      %s164 = smul.u32 2, %s19
      %p165 = scmp.lt.s32.totalorder %s18, 1
      %s166 = scalar_select %p165, %s18, 1
      %p167 = scmp.lt.s32.totalorder %s164, 1
      %s168 = scalar_select %p167, %s164, 1
      %s169 = smul.addr %s166, 2
      %s170 = sadd.s32 %s168, %s169
      %s171 = smul.addr %s170, 4
      %s172 = scalar_lea.vmem %s0, %s171
      %p173 = pneg %p49
      %p174 = pneg %p46
      %p175 = pneg %p70
      %p176 = pneg %p67
      %p177 = pneg %p91
      %p178 = pneg %p88
      %p179 = pneg %p119
      %p180 = pneg %p116
      %s181 = smul.u32 2, %s19
      %p182 = scmp.lt.s32.totalorder %s18, 1
      %s183 = scalar_select %p182, %s18, 1
      %p184 = scmp.lt.s32.totalorder %s181, 1
      %s185 = scalar_select %p184, %s181, 1
      %s186 = smul.addr %s183, 2
      %s187 = sadd.s32 %s185, %s186
      %s188 = smul.addr %s187, 4
      %s189 = scalar_lea.vmem %s3, %s188
      %s190 = smul.u32 2, %s19
      %p191 = scmp.lt.s32.totalorder %s18, 1
      %s192 = scalar_select %p191, %s18, 1
      %p193 = scmp.lt.s32.totalorder %s190, 1
      %s194 = scalar_select %p193, %s190, 1
      %s195 = smul.addr %s192, 2
      %s196 = sadd.s32 %s194, %s195
      %s197 = smul.addr %s196, 4
      %s198 = scalar_lea.vmem %s0, %s197
      %s199 = smul.u32 2, %s19
      %s200 = smul.u32 2, %s19
      %p201 = scmp.lt.s32.totalorder %s18, 1
      %s202 = scalar_select %p201, %s18, 1
      %p203 = scmp.lt.s32.totalorder %s200, 1
      %s204 = scalar_select %p203, %s200, 1
      %s205 = smul.addr %s202, 2
      %s206 = sadd.s32 %s204, %s205
      %s207 = smul.addr %s206, 4
      %s208 = scalar_lea.vmem %s3, %s207
      %s209 = smul.u32 2, %s19
      %v210 = vld [vmem:[%s1] sm:$0x7]
      %v211 = vld [vmem:[%s2] sm:$0x7]
      %v212 = vld [vmem:[%s198] sm:$0xff]
      %214 = vset.pattern.permute.xlu0 0
      %215 = vperm.xlu0 %214, %v211
      %v216 = vpop.permute.xlu0 %215
      %v219 = vcombine.high %v212, %v212
      %vm220 = vcmask 31744
      %v222 = vsel %vm220, %v210, 0
      %vm224 = vcmask 1043456
      %v225 = vsel %vm224, %v212, 0
      %v227 = vsel %vm224, %v219, 0
      %v229 = vand.u32 %v227, 4294901760
      %230 = vmatprep.subr.mxu0 %v229
      %v231 = vand.u32 %v225, 4294901760
      %232 = vmatpush1.msra.mxu0 %v231
      %233 = vmatprep.subr.mxu0 0.0
      %234 = vmatpush1.msra.mxu0 0.0
      %235 = vmatprep.subr.mxu0 0.0
      %236 = vmatpush1.msra.mxu0 0.0
      %237 = vmatprep.subr.mxu0 0.0
      %238 = vmatpush1.msra.mxu0 0.0
      %239 = vmatprep.subr.mxu0 0.0
      %240 = vmatpush1.msra.mxu0 0.0
      %241 = vmatprep.subr.mxu0 0.0
      %242 = vmatpush1.msra.mxu0 0.0
      %243 = vmatprep.subr.mxu0 0.0
      %244 = vmatpush1.msra.mxu0 0.0
      %245 = vmatprep.subr.mxu0 0.0
      %246 = vmatpush1.msra.mxu0 0.0
      %247 = vmatprep.subr.mxu0 0.0
      %248 = vmatpush1.msra.mxu0 0.0
      %249 = vmatprep.subr.mxu0 0.0
      %250 = vmatpush1.msra.mxu0 0.0
      %251 = vmatprep.subr.mxu0 0.0
      %252 = vmatpush1.msra.mxu0 0.0
      %253 = vmatprep.subr.mxu0 0.0
      %254 = vmatpush1.msra.mxu0 0.0
      %255 = vmatprep.subr.mxu0 0.0
      %256 = vmatpush1.msra.mxu0 0.0
      %257 = vmatprep.subr.mxu0 0.0
      %258 = vmatpush1.msra.mxu0 0.0
      %259 = vmatprep.subr.mxu0 0.0
      %260 = vmatpush1.msra.mxu0 0.0
      %261 = vmatprep.subr.mxu0 0.0
      %262 = vmatpush1.msra.mxu0 0.0
      %263 = vmatprep.subr.mxu0 0.0
      %264 = vmatpush1.msra.mxu0 0.0
      %265 = vmatprep.subr.mxu0 0.0
      %266 = vmatpush1.msra.mxu0 0.0
      %267 = vmatprep.subr.mxu0 0.0
      %268 = vmatpush1.msra.mxu0 0.0
      %269 = vmatprep.subr.mxu0 0.0
      %270 = vmatpush1.msra.mxu0 0.0
      %271 = vmatprep.subr.mxu0 0.0
      %272 = vmatpush1.msra.mxu0 0.0
      %273 = vmatprep.subr.mxu0 0.0
      %274 = vmatpush1.msra.mxu0 0.0
      %275 = vmatprep.subr.mxu0 0.0
      %276 = vmatpush1.msra.mxu0 0.0
      %277 = vmatprep.subr.mxu0 0.0
      %278 = vmatpush1.msra.mxu0 0.0
      %279 = vmatprep.subr.mxu0 0.0
      %280 = vmatpush1.msra.mxu0 0.0
      %281 = vmatprep.subr.mxu0 0.0
      %282 = vmatpush1.msra.mxu0 0.0
      %283 = vmatprep.subr.mxu0 0.0
      %284 = vmatpush1.msra.mxu0 0.0
      %285 = vmatprep.subr.mxu0 0.0
      %286 = vmatpush1.msra.mxu0 0.0
      %287 = vmatprep.subr.mxu0 0.0
      %288 = vmatpush1.msra.mxu0 0.0
      %289 = vmatprep.subr.mxu0 0.0
      %290 = vmatpush1.msra.mxu0 0.0
      %291 = vmatprep.subr.mxu0 0.0
      %292 = vmatpush1.msra.mxu0 0.0
      %293 = vmatprep.subr.mxu0 0.0
      %294 = vmatpush1.msra.mxu0 0.0
      %295 = vmatprep.mubr.f32.mxu0 0.0
      %v296 = vand.u32 %v222, 4294901760
      %v297 = vsub.f32 %v222, %v296
      %v298 = vand.u32 %v297, 4294901760
      %v299 = vsub.f32 %v297, %v298
      %v300 = vand.u32 %v299, 4294901760
      %301 = vmatmul.mubr.f32.gmra.mrb[0].mxu0 %v300
      %v302 = vpop.f32.mrb[0].mxu0
      %v303 = vadd.f32 %v216, %v302
      %v304 = vpop.f32.mrb[0].mxu0
      %v305 = vadd.f32 %v216, %v304
      %306 = vdwg.mxu0
      %v307 = vand.u32 %v227, 4294901760
      %v308 = vsub.f32 %v227, %v307
      %v309 = vand.u32 %v308, 4294901760
      %v310 = vsub.f32 %v308, %v309
      %v311 = vand.u32 %v310, 4294901760
      %312 = vmatprep.subr.mxu0 %v311
      %v313 = vand.u32 %v225, 4294901760
      %v314 = vsub.f32 %v225, %v313
      %v315 = vand.u32 %v314, 4294901760
      %v316 = vsub.f32 %v314, %v315
      %v317 = vand.u32 %v316, 4294901760
      %318 = vmatpush1.msra.mxu0 %v317
      %319 = vmatprep.subr.mxu0 0.0
      %320 = vmatpush1.msra.mxu0 0.0
      %321 = vmatprep.subr.mxu0 0.0
      %322 = vmatpush1.msra.mxu0 0.0
      %323 = vmatprep.subr.mxu0 0.0
      %324 = vmatpush1.msra.mxu0 0.0
      %325 = vmatprep.subr.mxu0 0.0
      %326 = vmatpush1.msra.mxu0 0.0
      %327 = vmatprep.subr.mxu0 0.0
      %328 = vmatpush1.msra.mxu0 0.0
      %329 = vmatprep.subr.mxu0 0.0
      %330 = vmatpush1.msra.mxu0 0.0
      %331 = vmatprep.subr.mxu0 0.0
      %332 = vmatpush1.msra.mxu0 0.0
      %333 = vmatprep.subr.mxu0 0.0
      %334 = vmatpush1.msra.mxu0 0.0
      %335 = vmatprep.subr.mxu0 0.0
      %336 = vmatpush1.msra.mxu0 0.0
      %337 = vmatprep.subr.mxu0 0.0
      %338 = vmatpush1.msra.mxu0 0.0
      %339 = vmatprep.subr.mxu0 0.0
      %340 = vmatpush1.msra.mxu0 0.0
      %341 = vmatprep.subr.mxu0 0.0
      %342 = vmatpush1.msra.mxu0 0.0
      %343 = vmatprep.subr.mxu0 0.0
      %344 = vmatpush1.msra.mxu0 0.0
      %345 = vmatprep.subr.mxu0 0.0
      %346 = vmatpush1.msra.mxu0 0.0
      %347 = vmatprep.subr.mxu0 0.0
      %348 = vmatpush1.msra.mxu0 0.0
      %349 = vmatprep.subr.mxu0 0.0
      %350 = vmatpush1.msra.mxu0 0.0
      %351 = vmatprep.subr.mxu0 0.0
      %352 = vmatpush1.msra.mxu0 0.0
      %353 = vmatprep.subr.mxu0 0.0
      %354 = vmatpush1.msra.mxu0 0.0
      %355 = vmatprep.subr.mxu0 0.0
      %356 = vmatpush1.msra.mxu0 0.0
      %357 = vmatprep.subr.mxu0 0.0
      %358 = vmatpush1.msra.mxu0 0.0
      %359 = vmatprep.subr.mxu0 0.0
      %360 = vmatpush1.msra.mxu0 0.0
      %361 = vmatprep.subr.mxu0 0.0
      %362 = vmatpush1.msra.mxu0 0.0
      %363 = vmatprep.subr.mxu0 0.0
      %364 = vmatpush1.msra.mxu0 0.0
      %365 = vmatprep.subr.mxu0 0.0
      %366 = vmatpush1.msra.mxu0 0.0
      %367 = vmatprep.subr.mxu0 0.0
      %368 = vmatpush1.msra.mxu0 0.0
      %369 = vmatprep.subr.mxu0 0.0
      %370 = vmatpush1.msra.mxu0 0.0
      %371 = vmatprep.subr.mxu0 0.0
      %372 = vmatpush1.msra.mxu0 0.0
      %373 = vmatprep.subr.mxu0 0.0
      %374 = vmatpush1.msra.mxu0 0.0
      %375 = vmatprep.subr.mxu0 0.0
      %376 = vmatpush1.msra.mxu0 0.0
      %377 = vmatprep.subr.mxu0 0.0
      %378 = vmatpush1.msra.mxu0 0.0
      %379 = vmatprep.subr.mxu0 0.0
      %380 = vmatpush1.msra.mxu0 0.0
      %381 = vmatprep.mubr.f32.mxu0 0.0
      %v382 = vand.u32 %v222, 4294901760
      %383 = vmatmul.mubr.f32.gmra.mrb[0].mxu0 %v382
      %v384 = vpop.f32.mrb[0].mxu0
      %v385 = vadd.f32 %v303, %v384
      %v386 = vpop.f32.mrb[0].mxu0
      %v387 = vadd.f32 %v305, %v386
      %388 = vdwg.mxu0
      %v389 = vand.u32 %v227, 4294901760
      %v390 = vsub.f32 %v227, %v389
      %391 = vmatprep.subr.mxu0 %v390
      %v392 = vand.u32 %v225, 4294901760
      %v393 = vsub.f32 %v225, %v392
      %394 = vmatpush1.msra.mxu0 %v393
      %395 = vmatprep.subr.mxu0 0.0
      %396 = vmatpush1.msra.mxu0 0.0
      %397 = vmatprep.subr.mxu0 0.0
      %398 = vmatpush1.msra.mxu0 0.0
      %399 = vmatprep.subr.mxu0 0.0
      %400 = vmatpush1.msra.mxu0 0.0
      %401 = vmatprep.subr.mxu0 0.0
      %402 = vmatpush1.msra.mxu0 0.0
      %403 = vmatprep.subr.mxu0 0.0
      %404 = vmatpush1.msra.mxu0 0.0
      %405 = vmatprep.subr.mxu0 0.0
      %406 = vmatpush1.msra.mxu0 0.0
      %407 = vmatprep.subr.mxu0 0.0
      %408 = vmatpush1.msra.mxu0 0.0
      %409 = vmatprep.subr.mxu0 0.0
      %410 = vmatpush1.msra.mxu0 0.0
      %411 = vmatprep.subr.mxu0 0.0
      %412 = vmatpush1.msra.mxu0 0.0
      %413 = vmatprep.subr.mxu0 0.0
      %414 = vmatpush1.msra.mxu0 0.0
      %415 = vmatprep.subr.mxu0 0.0
      %416 = vmatpush1.msra.mxu0 0.0
      %417 = vmatprep.subr.mxu0 0.0
      %418 = vmatpush1.msra.mxu0 0.0
      %419 = vmatprep.subr.mxu0 0.0
      %420 = vmatpush1.msra.mxu0 0.0
      %421 = vmatprep.subr.mxu0 0.0
      %422 = vmatpush1.msra.mxu0 0.0
      %423 = vmatprep.subr.mxu0 0.0
      %424 = vmatpush1.msra.mxu0 0.0
      %425 = vmatprep.subr.mxu0 0.0
      %426 = vmatpush1.msra.mxu0 0.0
      %427 = vmatprep.subr.mxu0 0.0
      %428 = vmatpush1.msra.mxu0 0.0
      %429 = vmatprep.subr.mxu0 0.0
      %430 = vmatpush1.msra.mxu0 0.0
      %431 = vmatprep.subr.mxu0 0.0
      %432 = vmatpush1.msra.mxu0 0.0
      %433 = vmatprep.subr.mxu0 0.0
      %434 = vmatpush1.msra.mxu0 0.0
      %435 = vmatprep.subr.mxu0 0.0
      %436 = vmatpush1.msra.mxu0 0.0
      %437 = vmatprep.subr.mxu0 0.0
      %438 = vmatpush1.msra.mxu0 0.0
      %439 = vmatprep.subr.mxu0 0.0
      %440 = vmatpush1.msra.mxu0 0.0
      %441 = vmatprep.subr.mxu0 0.0
      %442 = vmatpush1.msra.mxu0 0.0
      %443 = vmatprep.subr.mxu0 0.0
      %444 = vmatpush1.msra.mxu0 0.0
      %445 = vmatprep.subr.mxu0 0.0
      %446 = vmatpush1.msra.mxu0 0.0
      %447 = vmatprep.subr.mxu0 0.0
      %448 = vmatpush1.msra.mxu0 0.0
      %449 = vmatprep.subr.mxu0 0.0
      %450 = vmatpush1.msra.mxu0 0.0
      %451 = vmatprep.subr.mxu0 0.0
      %452 = vmatpush1.msra.mxu0 0.0
      %453 = vmatprep.subr.mxu0 0.0
      %454 = vmatpush1.msra.mxu0 0.0
      %455 = vmatprep.subr.mxu0 0.0
      %456 = vmatpush1.msra.mxu0 0.0
      %457 = vmatprep.mubr.f32.mxu0 0.0
      %v458 = vand.u32 %v222, 4294901760
      %v459 = vsub.f32 %v222, %v458
      %460 = vmatmul.mubr.f32.gmra.mrb[0].mxu0 %v459
      %v461 = vpop.f32.mrb[0].mxu0
      %v462 = vadd.f32 %v385, %v461
      %v463 = vpop.f32.mrb[0].mxu0
      %v464 = vadd.f32 %v387, %v463
      %465 = vdwg.mxu0
      %v466 = vand.u32 %v227, 4294901760
      %467 = vmatprep.subr.mxu0 %v466
      %v468 = vand.u32 %v225, 4294901760
      %469 = vmatpush1.msra.mxu0 %v468
      %470 = vmatprep.subr.mxu0 0.0
      %471 = vmatpush1.msra.mxu0 0.0
      %472 = vmatprep.subr.mxu0 0.0
      %473 = vmatpush1.msra.mxu0 0.0
      %474 = vmatprep.subr.mxu0 0.0
      %475 = vmatpush1.msra.mxu0 0.0
      %476 = vmatprep.subr.mxu0 0.0
      %477 = vmatpush1.msra.mxu0 0.0
      %478 = vmatprep.subr.mxu0 0.0
      %479 = vmatpush1.msra.mxu0 0.0
      %480 = vmatprep.subr.mxu0 0.0
      %481 = vmatpush1.msra.mxu0 0.0
      %482 = vmatprep.subr.mxu0 0.0
      %483 = vmatpush1.msra.mxu0 0.0
      %484 = vmatprep.subr.mxu0 0.0
      %485 = vmatpush1.msra.mxu0 0.0
      %486 = vmatprep.subr.mxu0 0.0
      %487 = vmatpush1.msra.mxu0 0.0
      %488 = vmatprep.subr.mxu0 0.0
      %489 = vmatpush1.msra.mxu0 0.0
      %490 = vmatprep.subr.mxu0 0.0
      %491 = vmatpush1.msra.mxu0 0.0
      %492 = vmatprep.subr.mxu0 0.0
      %493 = vmatpush1.msra.mxu0 0.0
      %494 = vmatprep.subr.mxu0 0.0
      %495 = vmatpush1.msra.mxu0 0.0
      %496 = vmatprep.subr.mxu0 0.0
      %497 = vmatpush1.msra.mxu0 0.0
      %498 = vmatprep.subr.mxu0 0.0
      %499 = vmatpush1.msra.mxu0 0.0
      %500 = vmatprep.subr.mxu0 0.0
      %501 = vmatpush1.msra.mxu0 0.0
      %502 = vmatprep.subr.mxu0 0.0
      %503 = vmatpush1.msra.mxu0 0.0
      %504 = vmatprep.subr.mxu0 0.0
      %505 = vmatpush1.msra.mxu0 0.0
      %506 = vmatprep.subr.mxu0 0.0
      %507 = vmatpush1.msra.mxu0 0.0
      %508 = vmatprep.subr.mxu0 0.0
      %509 = vmatpush1.msra.mxu0 0.0
      %510 = vmatprep.subr.mxu0 0.0
      %511 = vmatpush1.msra.mxu0 0.0
      %512 = vmatprep.subr.mxu0 0.0
      %513 = vmatpush1.msra.mxu0 0.0
      %514 = vmatprep.subr.mxu0 0.0
      %515 = vmatpush1.msra.mxu0 0.0
      %516 = vmatprep.subr.mxu0 0.0
      %517 = vmatpush1.msra.mxu0 0.0
      %518 = vmatprep.subr.mxu0 0.0
      %519 = vmatpush1.msra.mxu0 0.0
      %520 = vmatprep.subr.mxu0 0.0
      %521 = vmatpush1.msra.mxu0 0.0
      %522 = vmatprep.subr.mxu0 0.0
      %523 = vmatpush1.msra.mxu0 0.0
      %524 = vmatprep.subr.mxu0 0.0
      %525 = vmatpush1.msra.mxu0 0.0
      %526 = vmatprep.subr.mxu0 0.0
      %527 = vmatpush1.msra.mxu0 0.0
      %528 = vmatprep.subr.mxu0 0.0
      %529 = vmatpush1.msra.mxu0 0.0
      %530 = vmatprep.subr.mxu0 0.0
      %531 = vmatpush1.msra.mxu0 0.0
      %532 = vmatprep.mubr.f32.mxu0 0.0
      %v533 = vand.u32 %v222, 4294901760
      %v534 = vsub.f32 %v222, %v533
      %v535 = vand.u32 %v534, 4294901760
      %536 = vmatmul.mubr.f32.gmra.mrb[0].mxu0 %v535
      %v537 = vpop.f32.mrb[0].mxu0
      %v538 = vadd.f32 %v462, %v537
      %v539 = vpop.f32.mrb[0].mxu0
      %v540 = vadd.f32 %v464, %v539
      %541 = vdwg.mxu0
      %v542 = vand.u32 %v227, 4294901760
      %v543 = vsub.f32 %v227, %v542
      %v544 = vand.u32 %v543, 4294901760
      %545 = vmatprep.subr.mxu0 %v544
      %v546 = vand.u32 %v225, 4294901760
      %v547 = vsub.f32 %v225, %v546
      %v548 = vand.u32 %v547, 4294901760
      %549 = vmatpush1.msra.mxu0 %v548
      %550 = vmatprep.subr.mxu0 0.0
      %551 = vmatpush1.msra.mxu0 0.0
      %552 = vmatprep.subr.mxu0 0.0
      %553 = vmatpush1.msra.mxu0 0.0
      %554 = vmatprep.subr.mxu0 0.0
      %555 = vmatpush1.msra.mxu0 0.0
      %556 = vmatprep.subr.mxu0 0.0
      %557 = vmatpush1.msra.mxu0 0.0
      %558 = vmatprep.subr.mxu0 0.0
      %559 = vmatpush1.msra.mxu0 0.0
      %560 = vmatprep.subr.mxu0 0.0
      %561 = vmatpush1.msra.mxu0 0.0
      %562 = vmatprep.subr.mxu0 0.0
      %563 = vmatpush1.msra.mxu0 0.0
      %564 = vmatprep.subr.mxu0 0.0
      %565 = vmatpush1.msra.mxu0 0.0
      %566 = vmatprep.subr.mxu0 0.0
      %567 = vmatpush1.msra.mxu0 0.0
      %568 = vmatprep.subr.mxu0 0.0
      %569 = vmatpush1.msra.mxu0 0.0
      %570 = vmatprep.subr.mxu0 0.0
      %571 = vmatpush1.msra.mxu0 0.0
      %572 = vmatprep.subr.mxu0 0.0
      %573 = vmatpush1.msra.mxu0 0.0
      %574 = vmatprep.subr.mxu0 0.0
      %575 = vmatpush1.msra.mxu0 0.0
      %576 = vmatprep.subr.mxu0 0.0
      %577 = vmatpush1.msra.mxu0 0.0
      %578 = vmatprep.subr.mxu0 0.0
      %579 = vmatpush1.msra.mxu0 0.0
      %580 = vmatprep.subr.mxu0 0.0
      %581 = vmatpush1.msra.mxu0 0.0
      %582 = vmatprep.subr.mxu0 0.0
      %583 = vmatpush1.msra.mxu0 0.0
      %584 = vmatprep.subr.mxu0 0.0
      %585 = vmatpush1.msra.mxu0 0.0
      %586 = vmatprep.subr.mxu0 0.0
      %587 = vmatpush1.msra.mxu0 0.0
      %588 = vmatprep.subr.mxu0 0.0
      %589 = vmatpush1.msra.mxu0 0.0
      %590 = vmatprep.subr.mxu0 0.0
      %591 = vmatpush1.msra.mxu0 0.0
      %592 = vmatprep.subr.mxu0 0.0
      %593 = vmatpush1.msra.mxu0 0.0
      %594 = vmatprep.subr.mxu0 0.0
      %595 = vmatpush1.msra.mxu0 0.0
      %596 = vmatprep.subr.mxu0 0.0
      %597 = vmatpush1.msra.mxu0 0.0
      %598 = vmatprep.subr.mxu0 0.0
      %599 = vmatpush1.msra.mxu0 0.0
      %600 = vmatprep.subr.mxu0 0.0
      %601 = vmatpush1.msra.mxu0 0.0
      %602 = vmatprep.subr.mxu0 0.0
      %603 = vmatpush1.msra.mxu0 0.0
      %604 = vmatprep.subr.mxu0 0.0
      %605 = vmatpush1.msra.mxu0 0.0
      %606 = vmatprep.subr.mxu0 0.0
      %607 = vmatpush1.msra.mxu0 0.0
      %608 = vmatprep.subr.mxu0 0.0
      %609 = vmatpush1.msra.mxu0 0.0
      %610 = vmatprep.subr.mxu0 0.0
      %611 = vmatpush1.msra.mxu0 0.0
      %612 = vmatprep.mubr.f32.mxu0 0.0
      %v613 = vand.u32 %v222, 4294901760
      %614 = vmatmul.mubr.f32.gmra.mrb[0].mxu0 %v613
      %v615 = vpop.f32.mrb[0].mxu0
      %v616 = vadd.f32 %v538, %v615
      %v617 = vpop.f32.mrb[0].mxu0
      %v618 = vadd.f32 %v540, %v617
      %619 = vdwg.mxu0
      %v620 = vand.u32 %v227, 4294901760
      %621 = vmatprep.subr.mxu0 %v620
      %v622 = vand.u32 %v225, 4294901760
      %623 = vmatpush1.msra.mxu0 %v622
      %624 = vmatprep.subr.mxu0 0.0
      %625 = vmatpush1.msra.mxu0 0.0
      %626 = vmatprep.subr.mxu0 0.0
      %627 = vmatpush1.msra.mxu0 0.0
      %628 = vmatprep.subr.mxu0 0.0
      %629 = vmatpush1.msra.mxu0 0.0
      %630 = vmatprep.subr.mxu0 0.0
      %631 = vmatpush1.msra.mxu0 0.0
      %632 = vmatprep.subr.mxu0 0.0
      %633 = vmatpush1.msra.mxu0 0.0
      %634 = vmatprep.subr.mxu0 0.0
      %635 = vmatpush1.msra.mxu0 0.0
      %636 = vmatprep.subr.mxu0 0.0
      %637 = vmatpush1.msra.mxu0 0.0
      %638 = vmatprep.subr.mxu0 0.0
      %639 = vmatpush1.msra.mxu0 0.0
      %640 = vmatprep.subr.mxu0 0.0
      %641 = vmatpush1.msra.mxu0 0.0
      %642 = vmatprep.subr.mxu0 0.0
      %643 = vmatpush1.msra.mxu0 0.0
      %644 = vmatprep.subr.mxu0 0.0
      %645 = vmatpush1.msra.mxu0 0.0
      %646 = vmatprep.subr.mxu0 0.0
      %647 = vmatpush1.msra.mxu0 0.0
      %648 = vmatprep.subr.mxu0 0.0
      %649 = vmatpush1.msra.mxu0 0.0
      %650 = vmatprep.subr.mxu0 0.0
      %651 = vmatpush1.msra.mxu0 0.0
      %652 = vmatprep.subr.mxu0 0.0
      %653 = vmatpush1.msra.mxu0 0.0
      %654 = vmatprep.subr.mxu0 0.0
      %655 = vmatpush1.msra.mxu0 0.0
      %656 = vmatprep.subr.mxu0 0.0
      %657 = vmatpush1.msra.mxu0 0.0
      %658 = vmatprep.subr.mxu0 0.0
      %659 = vmatpush1.msra.mxu0 0.0
      %660 = vmatprep.subr.mxu0 0.0
      %661 = vmatpush1.msra.mxu0 0.0
      %662 = vmatprep.subr.mxu0 0.0
      %663 = vmatpush1.msra.mxu0 0.0
      %664 = vmatprep.subr.mxu0 0.0
      %665 = vmatpush1.msra.mxu0 0.0
      %666 = vmatprep.subr.mxu0 0.0
      %667 = vmatpush1.msra.mxu0 0.0
      %668 = vmatprep.subr.mxu0 0.0
      %669 = vmatpush1.msra.mxu0 0.0
      %670 = vmatprep.subr.mxu0 0.0
      %671 = vmatpush1.msra.mxu0 0.0
      %672 = vmatprep.subr.mxu0 0.0
      %673 = vmatpush1.msra.mxu0 0.0
      %674 = vmatprep.subr.mxu0 0.0
      %675 = vmatpush1.msra.mxu0 0.0
      %676 = vmatprep.subr.mxu0 0.0
      %677 = vmatpush1.msra.mxu0 0.0
      %678 = vmatprep.subr.mxu0 0.0
      %679 = vmatpush1.msra.mxu0 0.0
      %680 = vmatprep.subr.mxu0 0.0
      %681 = vmatpush1.msra.mxu0 0.0
      %682 = vmatprep.subr.mxu0 0.0
      %683 = vmatpush1.msra.mxu0 0.0
      %684 = vmatprep.subr.mxu0 0.0
      %685 = vmatpush1.msra.mxu0 0.0
      %686 = vmatprep.mubr.f32.mxu0 0.0
      %v687 = vand.u32 %v222, 4294901760
      %688 = vmatmul.mubr.f32.gmra.mrb[0].mxu0 %v687
      %v689 = vpop.f32.mrb[0].mxu0
      %v690 = vadd.f32 %v616, %v689
      %v691 = vpop.f32.mrb[0].mxu0
      %v692 = vadd.f32 %v618, %v691
      %693 = vdwg.mxu0
      %v696 = vcombine.low %v690, %v692
      %698 = vst [vmem:[%s208] sm:$0x77] %v696
      %s699 = smul.u32 2, %s19
      %p700 = scmp.lt.s32.totalorder %s18, 1
      %s701 = scalar_select %p700, %s18, 1
      %p702 = scmp.lt.s32.totalorder %s699, 1
      %s703 = scalar_select %p702, %s699, 1
      %s704 = smul.addr %s701, 2
      %s705 = sadd.s32 %s703, %s704
      %s706 = smul.addr %s705, 4
      %s707 = scalar_lea.vmem %s3, %s706
      // Predicated region
      $region33: #{outconv_forward.1} parent=31 // pred_check
        %p708 = pneg %p116
      $region34: #{outconv_forward.1} parent=31 // pred_check_branch
        %710 = sbr.rel (%p708) target = $region36
      $region35: #{outconv_forward.1} parent=31 // pred_region
        %s711 = smul.u32 2, %s19
      $region36: #{outconv_forward.1} parent=31 // pred_fallthru
        _
    $region32: #{outconv_forward.1} parent=5 // pred_fallthru
      _
    %p712 = scmp.le.s32.totalorder 2, %s9
    // Predicated region
    $region37: #{outconv_forward.1} parent=5 // pred_check
      %p713 = pneg %p712
    $region38: #{outconv_forward.1} parent=5 // pred_check_branch
      %715 = sbr.rel (%p713) target = $region40
    $region39: #{outconv_forward.1} parent=5 // pred_region
      %s716 = ssub.s32 %s9, 2
      // Predicated region
      $region41: #{outconv_forward.1} parent=39 // pred_check
        %p717 = pneg %p122
      $region42: #{outconv_forward.1} parent=39 // pred_check_branch
        %719 = sbr.rel (%p717) target = $region44
      $region43: #{outconv_forward.1} parent=39 // pred_region
        %s720 = smul.u32 2, %s21
        %p721 = scmp.lt.s32.totalorder %s20, 1
        %s722 = scalar_select %p721, %s20, 1
        %p723 = scmp.lt.s32.totalorder %s720, 1
        %s724 = scalar_select %p723, %s720, 1
        %s725 = smul.addr %s722, 2
        %s726 = sadd.s32 %s724, %s725
        %s727 = smul.addr %s726, 4
        %s728 = scalar_lea.vmem %s3, %s727
      $region44: #{outconv_forward.1} parent=39 // pred_fallthru
        _
    $region40: #{outconv_forward.1} parent=5 // pred_fallthru
      _
  $region6: #{outconv_forward.1} parent=0 // loop_footer
    %s13 = sadd.s32 1, %s9
  $region7: #{outconv_forward.1} parent=0 // loop_footer_branch
    %8 = sbr.rel target = $region3
  $region8: #{outconv_forward.1} parent=0 // loop_exit
    _

</llo_original>
